<compile_context>
chip_gen: v5e
topology: v5e:2x2
jax: 0.10.0
libtpu: 0.0.40
codegen_flags: <defaults>
</compile_context>

<pallas_src>
import jax
import jax.numpy as jnp
import numpy as np
from jax.experimental import pallas as pl
from jax.experimental.pallas import tpu as pltpu


def _dice_partial_kernel(probas_ref, targets_ref, inter2_ref, card_ref):
    hi = pl.program_id(1)  # reduction (H-tile) axis — last in the grid

    @pl.when(hi == 0)
    def _():
        inter2_ref[...] = jnp.zeros_like(inter2_ref)
        card_ref[...] = jnp.zeros_like(card_ref)

    probas = probas_ref[...]          # (B, C, TH, TW) f32
    targets = targets_ref[...]        # (B, TH, TW)    i32
    B, C, TH, TW = probas.shape

    # s_p[j, h, w] = sum_c probas[j, c, h, w]   (leading-axis VPU adds)
    s_p = jnp.sum(probas, axis=1)                                   # (B, TH, TW)

    # s_t[j, h, w] = #{ i : targets[i, h, w] == j }  — one-hot built in-register
    cls = jax.lax.broadcasted_iota(jnp.int32, (C, B, TH, TW), 0)
    s_t = jnp.sum((targets[None, :, :, :] == cls).astype(jnp.float32),
                  axis=1)                                           # (C, TH, TW)

    # Per-tile partial reductions over H, keeping (class/batch j, w).
    # (B == C is enforced by the wrapper, matching the torch broadcast.)
    inter2_ref[...] += 2.0 * jnp.sum(s_p * s_t, axis=1)             # (B, TW)
    card_ref[...] += (float(B) * jnp.sum(s_p, axis=1)
                      + float(C) * jnp.sum(s_t, axis=1))            # (B, TW)


def _pick_tile_w(W):
    # Lane-aligned parallel tiles when W is large and 128-divisible; else full W.
    if W % 128 == 0 and W >= 256:
        for tw in (512, 256, 128):
            if W % tw == 0:
                return tw
    return W


def _pick_tile_h(B, C, H, tile_w, vmem_budget_bytes=10 * 1024 * 1024):
    # Rough per-H-row VMEM cost: double-buffered probas + targets blocks plus
    # ~1x probas-block worth of in-kernel intermediates (class-compare tensor).
    # Conservative budget so the default scoped VMEM works on v5e/v6e/v7x.
    bytes_per_row = (3 * B * C + 3 * B) * tile_w * 4
    max_rows = max(8, vmem_budget_bytes // max(bytes_per_row, 1))
    if H <= max_rows:
        return H
    th = (max_rows // 8) * 8
    while th >= 8:
        if H % th == 0:
            return th
        th -= 8
    return H  # fallback: no divisor found — use a single full-H block


def dice_loss(inputs, targets, smooth=1, *, tile_h=None, tile_w=None):
    """Pallas implementation of DiceLoss.forward.

    inputs:  (B, C, H, W) float logits ("probas" — no softmax, as in the original)
    targets: (B, 1, H, W) integer class labels in [0, C)
    """
    del smooth  # unused by the original forward (it hardcodes 1e-7)
    B, C, H, W = inputs.shape
    if B != C:
        # The original torch broadcast (B,C,H,W) * (B,C,1,H,W) only runs when B == C.
        raise ValueError("Original DiceLoss broadcasting requires batch == num_classes")
    if targets.ndim == 4:
        targets = targets[:, 0]
    if targets.shape != (B, H, W):
        raise ValueError("targets must have shape (B, 1, H, W) or (B, H, W)")

    probas = inputs.astype(jnp.float32)
    labels = targets.astype(jnp.int32)

    tw = _pick_tile_w(W) if tile_w is None else tile_w
    th = _pick_tile_h(B, C, H, tw) if tile_h is None else tile_h
    assert W % tw == 0 and (tw == W or tw % 128 == 0), "bad W tile"
    assert H % th == 0 and (th == H or th % 8 == 0), "bad H tile"
    n_w = W // tw
    n_h = H // th

    inter2, card = pl.pallas_call(
        _dice_partial_kernel,
        grid=(n_w, n_h),
        in_specs=[
            pl.BlockSpec((B, C, th, tw), lambda wi, hi: (0, 0, hi, wi)),
            pl.BlockSpec((B, th, tw), lambda wi, hi: (0, hi, wi)),
        ],
        out_specs=[
            pl.BlockSpec((B, tw), lambda wi, hi: (0, wi)),
            pl.BlockSpec((B, tw), lambda wi, hi: (0, wi)),
        ],
        out_shape=[
            jax.ShapeDtypeStruct((B, W), jnp.float32),
            jax.ShapeDtypeStruct((B, W), jnp.float32),
        ],
        compiler_params=pltpu.CompilerParams(
            dimension_semantics=("parallel", "arbitrary")),
    )(probas, labels)

    # Tiny (B, W) epilogue: per-(class, w) ratio, then mean — done in plain JAX.
    dice = jnp.mean((inter2 + 1e-07) / (card + 1e-07))
    return 1.0 - dice


def dice_loss_ref(inputs, targets):
    """Literal line-by-line JAX port of the torch forward (reference)."""
    num_classes = inputs.shape[1]
    true_1_hot = jax.nn.one_hot(targets, num_classes, dtype=jnp.float32)  # (B,1,H,W,C)
    true_1_hot = jnp.transpose(true_1_hot, (0, 4, 1, 2, 3))               # (B,C,1,H,W)
    probas = inputs.astype(jnp.float32)
    dims = (0,) + tuple(range(2, targets.ndim))
    intersection = jnp.sum(probas * true_1_hot, axis=dims)
    cardinality = jnp.sum(probas + true_1_hot, axis=dims)
    dice = jnp.mean((2.0 * intersection + 1e-07) / (cardinality + 1e-07))
    return 1.0 - dice


if __name__ == "__main__":
    key = jax.random.PRNGKey(0)
    k1, k2 = jax.random.split(key)

    B = C = 4          # B must equal C for the original broadcasting to be valid
    H = W = 16
    inputs = jax.random.normal(k1, (B, C, H, W), dtype=jnp.float32)
    targets = jax.random.randint(k2, (B, 1, H, W), 0, C, dtype=jnp.int32)

    ref = dice_loss_ref(inputs, targets)

    # Auto tile sizes (single full block at this tiny shape).
    loss_auto = jax.block_until_ready(dice_loss(inputs, targets))
    np.testing.assert_allclose(np.asarray(loss_auto), np.asarray(ref),
                               rtol=1e-5, atol=1e-5)

    # Force a multi-step reduction grid (H tiled by 8) to exercise the
    # accumulate / init-at-first-step path.
    loss_tiled = jax.block_until_ready(dice_loss(inputs, targets, tile_h=8))
    np.testing.assert_allclose(np.asarray(loss_tiled), np.asarray(ref),
                               rtol=1e-5, atol=1e-5)

    print("KERNEL_OK")
</pallas_src>

<mosaic_0001>
module attributes {stable_mosaic.version = 11 : i64} {
  func.func @_dice_partial_kernel(%arg0: i32, %arg1: i32, %arg2: memref<4x4x16x16xf32, #tpu.memory_space<vmem>>, %arg3: memref<4x16x16xi32, #tpu.memory_space<vmem>>, %arg4: memref<4x16xf32, #tpu.memory_space<vmem>>, %arg5: memref<4x16xf32, #tpu.memory_space<vmem>>) attributes {dimension_semantics = [#tpu.dimension_semantics<parallel>, #tpu.dimension_semantics<arbitrary>], iteration_bounds = array<i64: 1, 1>, scalar_prefetch = 0 : i64, scratch_operands = 0 : i64, tpu.core_type = #tpu.core_type<tc>, window_params = [{transform_indices = @transform_0, window_bounds = array<i64: 4, 4, 16, 16>}, {transform_indices = @transform_1, window_bounds = array<i64: 4, 16, 16>}, {transform_indices = @transform_2, window_bounds = array<i64: 4, 16>}, {transform_indices = @transform_3, window_bounds = array<i64: 4, 16>}]} {
    %c0_i32 = arith.constant 0 : i32
    %0 = arith.cmpi eq, %arg1, %c0_i32 : i32
    %1 = arith.extui %0 : i1 to i32
    %c0_i32_0 = arith.constant 0 : i32
    %2 = arith.cmpi ne, %1, %c0_i32_0 : i32
    scf.if %2 {
      %cst_22 = arith.constant 0.000000e+00 : f32
      %30 = vector.broadcast %cst_22 : f32 to vector<4x16xf32>
      %c0_23 = arith.constant 0 : index
      %c0_24 = arith.constant 0 : index
      %31 = vector.load %arg4[%c0_23, %c0_24] : memref<4x16xf32, #tpu.memory_space<vmem>>, vector<4x16xf32>
      tpu.vector_store %arg4[%c0_23, %c0_24], %30 {strides = array<i32>} : memref<4x16xf32, #tpu.memory_space<vmem>>, vector<4x16xf32>,
      %cst_25 = arith.constant 0.000000e+00 : f32
      %32 = vector.broadcast %cst_25 : f32 to vector<4x16xf32>
      %c0_26 = arith.constant 0 : index
      %c0_27 = arith.constant 0 : index
      %33 = vector.load %arg5[%c0_26, %c0_27] : memref<4x16xf32, #tpu.memory_space<vmem>>, vector<4x16xf32>
      tpu.vector_store %arg5[%c0_26, %c0_27], %32 {strides = array<i32>} : memref<4x16xf32, #tpu.memory_space<vmem>>, vector<4x16xf32>,
    } else {
    }
    %c0 = arith.constant 0 : index
    %c0_1 = arith.constant 0 : index
    %c0_2 = arith.constant 0 : index
    %c0_3 = arith.constant 0 : index
    %3 = vector.load %arg2[%c0, %c0_1, %c0_2, %c0_3] : memref<4x4x16x16xf32, #tpu.memory_space<vmem>>, vector<4x4x16x16xf32>
    %c0_4 = arith.constant 0 : index
    %c0_5 = arith.constant 0 : index
    %c0_6 = arith.constant 0 : index
    %4 = vector.load %arg3[%c0_4, %c0_5, %c0_6] : memref<4x16x16xi32, #tpu.memory_space<vmem>>, vector<4x16x16xi32>
    %cst = arith.constant dense<0.000000e+00> : vector<4x16x16xf32>
    %5 = vector.multi_reduction <add>, %3, %cst [1] : vector<4x4x16x16xf32> to vector<4x16x16xf32>
    %6 = tpu.iota {dimensions = array<i32: 0>} : vector<4x4x16x16xi32>
    %7 = vector.shape_cast %4 : vector<4x16x16xi32> to vector<1x4x16x16xi32>
    %8 = vector.broadcast %7 : vector<1x4x16x16xi32> to vector<4x4x16x16xi32>
    %9 = arith.cmpi eq, %8, %6 : vector<4x4x16x16xi32>
    %10 = arith.extui %9 : vector<4x4x16x16xi1> to vector<4x4x16x16xi32>
    %11 = arith.sitofp %10 : vector<4x4x16x16xi32> to vector<4x4x16x16xf32>
    %cst_7 = arith.constant dense<0.000000e+00> : vector<4x16x16xf32>
    %12 = vector.multi_reduction <add>, %11, %cst_7 [1] : vector<4x4x16x16xf32> to vector<4x16x16xf32>
    %c0_8 = arith.constant 0 : index
    %c0_9 = arith.constant 0 : index
    %13 = vector.load %arg4[%c0_8, %c0_9] : memref<4x16xf32, #tpu.memory_space<vmem>>, vector<4x16xf32>
    %14 = arith.mulf %5, %12 : vector<4x16x16xf32>
    %cst_10 = arith.constant dense<0.000000e+00> : vector<4x16xf32>
    %15 = vector.multi_reduction <add>, %14, %cst_10 [1] : vector<4x16x16xf32> to vector<4x16xf32>
    %cst_11 = arith.constant 2.000000e+00 : f32
    %16 = vector.broadcast %cst_11 : f32 to vector<4x16xf32>
    %17 = arith.mulf %16, %15 : vector<4x16xf32>
    %18 = arith.addf %13, %17 : vector<4x16xf32>
    %c0_12 = arith.constant 0 : index
    %c0_13 = arith.constant 0 : index
    %19 = vector.load %arg4[%c0_12, %c0_13] : memref<4x16xf32, #tpu.memory_space<vmem>>, vector<4x16xf32>
    tpu.vector_store %arg4[%c0_12, %c0_13], %18 {strides = array<i32>} : memref<4x16xf32, #tpu.memory_space<vmem>>, vector<4x16xf32>,
    %c0_14 = arith.constant 0 : index
    %c0_15 = arith.constant 0 : index
    %20 = vector.load %arg5[%c0_14, %c0_15] : memref<4x16xf32, #tpu.memory_space<vmem>>, vector<4x16xf32>
    %cst_16 = arith.constant dense<0.000000e+00> : vector<4x16xf32>
    %21 = vector.multi_reduction <add>, %5, %cst_16 [1] : vector<4x16x16xf32> to vector<4x16xf32>
    %cst_17 = arith.constant 4.000000e+00 : f32
    %22 = vector.broadcast %cst_17 : f32 to vector<4x16xf32>
    %23 = arith.mulf %22, %21 : vector<4x16xf32>
    %cst_18 = arith.constant dense<0.000000e+00> : vector<4x16xf32>
    %24 = vector.multi_reduction <add>, %12, %cst_18 [1] : vector<4x16x16xf32> to vector<4x16xf32>
    %cst_19 = arith.constant 4.000000e+00 : f32
    %25 = vector.broadcast %cst_19 : f32 to vector<4x16xf32>
    %26 = arith.mulf %25, %24 : vector<4x16xf32>
    %27 = arith.addf %23, %26 : vector<4x16xf32>
    %28 = arith.addf %20, %27 : vector<4x16xf32>
    %c0_20 = arith.constant 0 : index
    %c0_21 = arith.constant 0 : index
    %29 = vector.load %arg5[%c0_20, %c0_21] : memref<4x16xf32, #tpu.memory_space<vmem>>, vector<4x16xf32>
    tpu.vector_store %arg5[%c0_20, %c0_21], %28 {strides = array<i32>} : memref<4x16xf32, #tpu.memory_space<vmem>>, vector<4x16xf32>,
    return
  }
  func.func @transform_0(%arg0: i32, %arg1: i32) -> (i32, i32, i32, i32) {
    %c0_i32 = arith.constant 0 : i32
    %c0_i32_0 = arith.constant 0 : i32
    %c0_i32_1 = arith.constant 0 : i32
    return %c0_i32, %c0_i32_0, %arg1, %arg0 : i32, i32, i32, i32
  }
  func.func @transform_1(%arg0: i32, %arg1: i32) -> (i32, i32, i32) {
    %c0_i32 = arith.constant 0 : i32
    %c0_i32_0 = arith.constant 0 : i32
    return %c0_i32, %arg1, %arg0 : i32, i32, i32
  }
  func.func @transform_2(%arg0: i32, %arg1: i32) -> (i32, i32) {
    %c0_i32 = arith.constant 0 : i32
    %c0_i32_0 = arith.constant 0 : i32
    return %c0_i32, %arg0 : i32, i32
  }
  func.func @transform_3(%arg0: i32, %arg1: i32) -> (i32, i32) {
    %c0_i32 = arith.constant 0 : i32
    %c0_i32_0 = arith.constant 0 : i32
    return %c0_i32, %arg0 : i32, i32
  }
}

</mosaic_0001>

<llo_original>
// kernel: tpu_custom_call.1
$region0: #{tpu_custom_call.1}
  #allocation0 [shape = 'u32[]', space=smem, size = 0x4, offset = 0x4, fixed_abs, tag = 'smem constant byte address 0x4 - core index']
  #allocation1 [shape = 'u32[72,128]{1,0:T(1,128)}', space=vmem, size = 0x9000, scoped, tag = 'internal scratch']
  %s0 = inlined_call_operand.hbm [shape: f32[4,4,16,16], index: 0, kind: input, shape index: {}]
  %s1 = inlined_call_operand.hbm [shape: s32[4,16,16], index: 1, kind: input, shape index: {}]
  %s2 = inlined_call_operand.hbm [shape: f32[4,16], index: 2, kind: output, shape index: {0}]
  %s3 = inlined_call_operand.hbm [shape: f32[4,16], index: 3, kind: output, shape index: {1}]
  %4 = xla_tuple %s2, %s3
  %s5 = sld [smem:[#allocation0]]
  $region38: #{tpu_custom_call.1} parent=0
    _
  %s7 = ssub.s32 1, %s5
  %s8 = scalar_select 0, %s7, %s5
  $region1: #{tpu_custom_call.1} parent=0
    #allocation2 [shape = 'u8[131072]{0}', space=vmem, size = 0x20000, scoped, tag = 'input window, operand 0, single buffered']
    #allocation3 [shape = 's32[1]{0}', space=sflag, size = 0x4, scoped, tag = 'scoped memory for tpu_custom_call.1']
    #allocation4 [shape = 's32[1]{0}', space=sflag, size = 0x4, scoped, tag = 'scoped memory for tpu_custom_call.1']
    #allocation5 [shape = 'u8[32768]{0}', space=vmem, size = 0x8000, scoped, tag = 'input window, operand 1, single buffered']
    #allocation6 [shape = 's32[1]{0}', space=sflag, size = 0x4, scoped, tag = 'scoped memory for tpu_custom_call.1']
    #allocation7 [shape = 'u8[2048]{0}', space=vmem, size = 0x800, scoped, tag = 'output window, operand 0, single buffered']
    #allocation8 [shape = 'u8[2048]{0}', space=vmem, size = 0x800, scoped, tag = 'output window, operand 1, single buffered']
    #allocation9 [shape = 's32[1]{0}', space=sflag, size = 0x4, scoped, tag = 'scoped memory for tpu_custom_call.1']
    %9 = vsyncpa [#allocation3], 0
    %10 = vsyncpa [#allocation6], 0
    %11 = vsyncpa [#allocation4], 0
    %12 = vsyncpa [#allocation9], 0
    // Predicated region
    $region2: #{tpu_custom_call.1} parent=1 // pred_check
      _
    $region3: #{tpu_custom_call.1} parent=1 // pred_check_branch
      %14 = sbr.rel (0) target = $region5
    $region4: #{tpu_custom_call.1} parent=1 // pred_region
      %16 = vsyncadd [#allocation3], 0
      %s17 = sshll.u32 %s0, 4
      %s18 = int_to_ptr.hbm [resolvable:$true] %s17
      %s19 = sshll.u32 [#allocation2], 4
      %s20 = int_to_ptr.vmem [resolvable:$true] %s19
      %25 = dma.hbm_to_vmem [thread:$0]  %s18, 4096, %s20, [#allocation3], 128, 128, 8
    $region5: #{tpu_custom_call.1} parent=1 // pred_fallthru
      _
    // Predicated region
    $region6: #{tpu_custom_call.1} parent=1 // pred_check
      _
    $region7: #{tpu_custom_call.1} parent=1 // pred_check_branch
      %27 = sbr.rel (0) target = $region9
    $region8: #{tpu_custom_call.1} parent=1 // pred_region
      %29 = vsyncadd [#allocation6], 0
      %s30 = sshll.u32 %s1, 4
      %s31 = int_to_ptr.hbm [resolvable:$true] %s30
      %s32 = sshll.u32 [#allocation5], 4
      %s33 = int_to_ptr.vmem [resolvable:$true] %s32
      %38 = dma.hbm_to_vmem [thread:$0]  %s31, 1024, %s33, [#allocation6], 128, 128, 8
    $region9: #{tpu_custom_call.1} parent=1 // pred_fallthru
      _
    // Predicated region
    $region10: #{tpu_custom_call.1} parent=1 // pred_check
      _
    $region11: #{tpu_custom_call.1} parent=1 // pred_check_branch
      %40 = sbr.rel (0) target = $region13
    $region12: #{tpu_custom_call.1} parent=1 // pred_region
      %42 = dma.done [#allocation3], 4096
    $region13: #{tpu_custom_call.1} parent=1 // pred_fallthru
      _
    // Predicated region
    $region14: #{tpu_custom_call.1} parent=1 // pred_check
      _
    $region15: #{tpu_custom_call.1} parent=1 // pred_check_branch
      %44 = sbr.rel (0) target = $region17
    $region16: #{tpu_custom_call.1} parent=1 // pred_region
      %46 = dma.done [#allocation6], 1024
    $region17: #{tpu_custom_call.1} parent=1 // pred_fallthru
      _
    %p47 = scmp.eq.s32.totalorder 0, 0
    // Predicated region
    $region18: #{tpu_custom_call.1} parent=1 // pred_check
      %p48 = pneg %p47
    $region19: #{tpu_custom_call.1} parent=1 // pred_check_branch
      %50 = sbr.rel (%p48) target = $region21
    $region20: #{tpu_custom_call.1} parent=1 // pred_region
      %vm51 = vcmask 125952
      %52 = vst.msk [vmem:[#allocation7] sm:$0xf] %vm51, 0.0
      %53 = vst.msk [vmem:[#allocation8] sm:$0xf] %vm51, 0.0
    $region21: #{tpu_custom_call.1} parent=1 // pred_fallthru
      _
    %v54 = vld [vmem:[#allocation2] sm:$0xff]
    %v55 = vld [vmem:[#allocation2 + $0x8] sm:$0xff]
    %v56 = vld [vmem:[#allocation2 + $0x10] sm:$0xff]
    %v57 = vld [vmem:[#allocation2 + $0x18] sm:$0xff]
    %v58 = vld [vmem:[#allocation2 + $0x20] sm:$0xff]
    %v59 = vld [vmem:[#allocation2 + $0x28] sm:$0xff]
    %v60 = vld [vmem:[#allocation2 + $0x30] sm:$0xff]
    %v61 = vld [vmem:[#allocation2 + $0x38] sm:$0xff]
    %v62 = vld [vmem:[#allocation2 + $0x40] sm:$0xff]
    %v63 = vld [vmem:[#allocation2 + $0x48] sm:$0xff]
    %v64 = vld [vmem:[#allocation2 + $0x50] sm:$0xff]
    %v65 = vld [vmem:[#allocation2 + $0x58] sm:$0xff]
    %v66 = vld [vmem:[#allocation2 + $0x60] sm:$0xff]
    %v67 = vld [vmem:[#allocation2 + $0x68] sm:$0xff]
    %v68 = vld [vmem:[#allocation2 + $0x70] sm:$0xff]
    %v69 = vld [vmem:[#allocation2 + $0x78] sm:$0xff]
    %v70 = vld [vmem:[#allocation2 + $0x80] sm:$0xff]
    %v71 = vld [vmem:[#allocation2 + $0x88] sm:$0xff]
    %v72 = vld [vmem:[#allocation2 + $0x90] sm:$0xff]
    %v73 = vld [vmem:[#allocation2 + $0x98] sm:$0xff]
    %v74 = vld [vmem:[#allocation2 + $0xa0] sm:$0xff]
    %v75 = vld [vmem:[#allocation2 + $0xa8] sm:$0xff]
    %v76 = vld [vmem:[#allocation2 + $0xb0] sm:$0xff]
    %v77 = vld [vmem:[#allocation2 + $0xb8] sm:$0xff]
    %v78 = vld [vmem:[#allocation2 + $0xc0] sm:$0xff]
    %v79 = vld [vmem:[#allocation2 + $0xc8] sm:$0xff]
    %v80 = vld [vmem:[#allocation2 + $0xd0] sm:$0xff]
    %v81 = vld [vmem:[#allocation2 + $0xd8] sm:$0xff]
    %v82 = vld [vmem:[#allocation2 + $0xe0] sm:$0xff]
    %v83 = vld [vmem:[#allocation2 + $0xe8] sm:$0xff]
    %v84 = vld [vmem:[#allocation2 + $0xf0] sm:$0xff]
    %v85 = vld [vmem:[#allocation2 + $0xf8] sm:$0xff]
    %v86 = vld [vmem:[#allocation5] sm:$0xff]
    %v87 = vld [vmem:[#allocation5 + $0x8] sm:$0xff]
    %v88 = vld [vmem:[#allocation5 + $0x10] sm:$0xff]
    %v89 = vld [vmem:[#allocation5 + $0x18] sm:$0xff]
    %v90 = vld [vmem:[#allocation5 + $0x20] sm:$0xff]
    %v91 = vld [vmem:[#allocation5 + $0x28] sm:$0xff]
    %v92 = vld [vmem:[#allocation5 + $0x30] sm:$0xff]
    %v93 = vld [vmem:[#allocation5 + $0x38] sm:$0xff]
    %vm94 = vcmask 130048
    %v95 = vsel %vm94, %v54, 0.0
    %v96 = vsel %vm94, %v56, 0.0
    %v97 = vadd.f32 %v95, %v96
    %v98 = vsel %vm94, %v58, 0.0
    %v99 = vadd.f32 %v97, %v98
    %v100 = vsel %vm94, %v60, 0.0
    %v101 = vadd.f32 %v99, %v100
    %v102 = vsel %vm94, %v55, 0.0
    %v103 = vsel %vm94, %v57, 0.0
    %v104 = vadd.f32 %v102, %v103
    %v105 = vsel %vm94, %v59, 0.0
    %v106 = vadd.f32 %v104, %v105
    %v107 = vsel %vm94, %v61, 0.0
    %v108 = vadd.f32 %v106, %v107
    %v109 = vsel %vm94, %v62, 0.0
    %v110 = vsel %vm94, %v64, 0.0
    %v111 = vadd.f32 %v109, %v110
    %v112 = vsel %vm94, %v66, 0.0
    %v113 = vadd.f32 %v111, %v112
    %v114 = vsel %vm94, %v68, 0.0
    %v115 = vadd.f32 %v113, %v114
    %v116 = vsel %vm94, %v63, 0.0
    %v117 = vsel %vm94, %v65, 0.0
    %v118 = vadd.f32 %v116, %v117
    %v119 = vsel %vm94, %v67, 0.0
    %v120 = vadd.f32 %v118, %v119
    %v121 = vsel %vm94, %v69, 0.0
    %v122 = vadd.f32 %v120, %v121
    %v123 = vsel %vm94, %v70, 0.0
    %v124 = vsel %vm94, %v72, 0.0
    %v125 = vadd.f32 %v123, %v124
    %v126 = vsel %vm94, %v74, 0.0
    %v127 = vadd.f32 %v125, %v126
    %v128 = vsel %vm94, %v76, 0.0
    %v129 = vadd.f32 %v127, %v128
    %v130 = vsel %vm94, %v71, 0.0
    %v131 = vsel %vm94, %v73, 0.0
    %v132 = vadd.f32 %v130, %v131
    %v133 = vsel %vm94, %v75, 0.0
    %v134 = vadd.f32 %v132, %v133
    %v135 = vsel %vm94, %v77, 0.0
    %v136 = vadd.f32 %v134, %v135
    %v137 = vsel %vm94, %v78, 0.0
    %v138 = vsel %vm94, %v80, 0.0
    %v139 = vadd.f32 %v137, %v138
    %v140 = vsel %vm94, %v82, 0.0
    %v141 = vadd.f32 %v139, %v140
    %v142 = vsel %vm94, %v84, 0.0
    %v143 = vadd.f32 %v141, %v142
    %v144 = vsel %vm94, %v79, 0.0
    %v145 = vsel %vm94, %v81, 0.0
    %v146 = vadd.f32 %v144, %v145
    %v147 = vsel %vm94, %v83, 0.0
    %v148 = vadd.f32 %v146, %v147
    %v149 = vsel %vm94, %v85, 0.0
    %v150 = vadd.f32 %v148, %v149
    %vm151 = vcmp.eq.s32.totalorder %v86, 0
    %vm152 = vcmp.eq.s32.totalorder %v87, 0
    %vm153 = vcmp.eq.s32.totalorder %v88, 0
    %vm154 = vcmp.eq.s32.totalorder %v89, 0
    %vm155 = vcmp.eq.s32.totalorder %v90, 0
    %vm156 = vcmp.eq.s32.totalorder %v91, 0
    %vm157 = vcmp.eq.s32.totalorder %v92, 0
    %vm158 = vcmp.eq.s32.totalorder %v93, 0
    %vm159 = vcmp.eq.s32.totalorder %v86, 1
    %vm160 = vcmp.eq.s32.totalorder %v87, 1
    %vm161 = vcmp.eq.s32.totalorder %v88, 1
    %vm162 = vcmp.eq.s32.totalorder %v89, 1
    %vm163 = vcmp.eq.s32.totalorder %v90, 1
    %vm164 = vcmp.eq.s32.totalorder %v91, 1
    %vm165 = vcmp.eq.s32.totalorder %v92, 1
    %vm166 = vcmp.eq.s32.totalorder %v93, 1
    %vm167 = vcmp.eq.s32.totalorder %v86, 2
    %vm168 = vcmp.eq.s32.totalorder %v87, 2
    %vm169 = vcmp.eq.s32.totalorder %v88, 2
    %vm170 = vcmp.eq.s32.totalorder %v89, 2
    %vm171 = vcmp.eq.s32.totalorder %v90, 2
    %vm172 = vcmp.eq.s32.totalorder %v91, 2
    %vm173 = vcmp.eq.s32.totalorder %v92, 2
    %vm174 = vcmp.eq.s32.totalorder %v93, 2
    %vm175 = vcmp.eq.s32.totalorder %v86, 3
    %vm176 = vcmp.eq.s32.totalorder %v87, 3
    %vm177 = vcmp.eq.s32.totalorder %v88, 3
    %vm178 = vcmp.eq.s32.totalorder %v89, 3
    %vm179 = vcmp.eq.s32.totalorder %v90, 3
    %vm180 = vcmp.eq.s32.totalorder %v91, 3
    %vm181 = vcmp.eq.s32.totalorder %v92, 3
    %vm182 = vcmp.eq.s32.totalorder %v93, 3
    %v183 = vsel %vm151, 1, 0
    %v184 = vsel %vm152, 1, 0
    %v185 = vsel %vm153, 1, 0
    %v186 = vsel %vm154, 1, 0
    %v187 = vsel %vm155, 1, 0
    %v188 = vsel %vm156, 1, 0
    %v189 = vsel %vm157, 1, 0
    %v190 = vsel %vm158, 1, 0
    %v191 = vsel %vm159, 1, 0
    %v192 = vsel %vm160, 1, 0
    %v193 = vsel %vm161, 1, 0
    %v194 = vsel %vm162, 1, 0
    %v195 = vsel %vm163, 1, 0
    %v196 = vsel %vm164, 1, 0
    %v197 = vsel %vm165, 1, 0
    %v198 = vsel %vm166, 1, 0
    %v199 = vsel %vm167, 1, 0
    %v200 = vsel %vm168, 1, 0
    %v201 = vsel %vm169, 1, 0
    %v202 = vsel %vm170, 1, 0
    %v203 = vsel %vm171, 1, 0
    %v204 = vsel %vm172, 1, 0
    %v205 = vsel %vm173, 1, 0
    %v206 = vsel %vm174, 1, 0
    %v207 = vsel %vm175, 1, 0
    %v208 = vsel %vm176, 1, 0
    %v209 = vsel %vm177, 1, 0
    %v210 = vsel %vm178, 1, 0
    %v211 = vsel %vm179, 1, 0
    %v212 = vsel %vm180, 1, 0
    %v213 = vsel %vm181, 1, 0
    %v214 = vsel %vm182, 1, 0
    %v215 = vcvt.s32.f32 %v183
    %v216 = vcvt.s32.f32 %v184
    %v217 = vcvt.s32.f32 %v185
    %v218 = vcvt.s32.f32 %v186
    %v219 = vcvt.s32.f32 %v187
    %v220 = vcvt.s32.f32 %v188
    %v221 = vcvt.s32.f32 %v189
    %v222 = vcvt.s32.f32 %v190
    %v223 = vcvt.s32.f32 %v191
    %v224 = vcvt.s32.f32 %v192
    %v225 = vcvt.s32.f32 %v193
    %v226 = vcvt.s32.f32 %v194
    %v227 = vcvt.s32.f32 %v195
    %v228 = vcvt.s32.f32 %v196
    %v229 = vcvt.s32.f32 %v197
    %v230 = vcvt.s32.f32 %v198
    %v231 = vcvt.s32.f32 %v199
    %v232 = vcvt.s32.f32 %v200
    %v233 = vcvt.s32.f32 %v201
    %v234 = vcvt.s32.f32 %v202
    %v235 = vcvt.s32.f32 %v203
    %v236 = vcvt.s32.f32 %v204
    %v237 = vcvt.s32.f32 %v205
    %v238 = vcvt.s32.f32 %v206
    %v239 = vcvt.s32.f32 %v207
    %v240 = vcvt.s32.f32 %v208
    %v241 = vcvt.s32.f32 %v209
    %v242 = vcvt.s32.f32 %v210
    %v243 = vcvt.s32.f32 %v211
    %v244 = vcvt.s32.f32 %v212
    %v245 = vcvt.s32.f32 %v213
    %v246 = vcvt.s32.f32 %v214
    %v247 = vsel %vm94, %v215, 0.0
    %v248 = vsel %vm94, %v217, 0.0
    %v249 = vadd.f32 %v247, %v248
    %v250 = vsel %vm94, %v219, 0.0
    %v251 = vadd.f32 %v249, %v250
    %v252 = vsel %vm94, %v221, 0.0
    %v253 = vadd.f32 %v251, %v252
    %v254 = vsel %vm94, %v216, 0.0
    %v255 = vsel %vm94, %v218, 0.0
    %v256 = vadd.f32 %v254, %v255
    %v257 = vsel %vm94, %v220, 0.0
    %v258 = vadd.f32 %v256, %v257
    %v259 = vsel %vm94, %v222, 0.0
    %v260 = vadd.f32 %v258, %v259
    %v261 = vsel %vm94, %v223, 0.0
    %v262 = vsel %vm94, %v225, 0.0
    %v263 = vadd.f32 %v261, %v262
    %v264 = vsel %vm94, %v227, 0.0
    %v265 = vadd.f32 %v263, %v264
    %v266 = vsel %vm94, %v229, 0.0
    %v267 = vadd.f32 %v265, %v266
    %v268 = vsel %vm94, %v224, 0.0
    %v269 = vsel %vm94, %v226, 0.0
    %v270 = vadd.f32 %v268, %v269
    %v271 = vsel %vm94, %v228, 0.0
    %v272 = vadd.f32 %v270, %v271
    %v273 = vsel %vm94, %v230, 0.0
    %v274 = vadd.f32 %v272, %v273
    %v275 = vsel %vm94, %v231, 0.0
    %v276 = vsel %vm94, %v233, 0.0
    %v277 = vadd.f32 %v275, %v276
    %v278 = vsel %vm94, %v235, 0.0
    %v279 = vadd.f32 %v277, %v278
    %v280 = vsel %vm94, %v237, 0.0
    %v281 = vadd.f32 %v279, %v280
    %v282 = vsel %vm94, %v232, 0.0
    %v283 = vsel %vm94, %v234, 0.0
    %v284 = vadd.f32 %v282, %v283
    %v285 = vsel %vm94, %v236, 0.0
    %v286 = vadd.f32 %v284, %v285
    %v287 = vsel %vm94, %v238, 0.0
    %v288 = vadd.f32 %v286, %v287
    %v289 = vsel %vm94, %v239, 0.0
    %v290 = vsel %vm94, %v241, 0.0
    %v291 = vadd.f32 %v289, %v290
    %v292 = vsel %vm94, %v243, 0.0
    %v293 = vadd.f32 %v291, %v292
    %v294 = vsel %vm94, %v245, 0.0
    %v295 = vadd.f32 %v293, %v294
    %v296 = vsel %vm94, %v240, 0.0
    %v297 = vsel %vm94, %v242, 0.0
    %v298 = vadd.f32 %v296, %v297
    %v299 = vsel %vm94, %v244, 0.0
    %v300 = vadd.f32 %v298, %v299
    %v301 = vsel %vm94, %v246, 0.0
    %v302 = vadd.f32 %v300, %v301
    %v303 = vld [vmem:[#allocation7] sm:$0xf]
    %v304 = vmul.f32 %v101, %v253
    %v305 = vmul.f32 %v108, %v260
    %v306 = vmul.f32 %v115, %v267
    %v307 = vmul.f32 %v122, %v274
    %v308 = vmul.f32 %v129, %v281
    %v309 = vmul.f32 %v136, %v288
    %v310 = vmul.f32 %v143, %v295
    %v311 = vmul.f32 %v150, %v302
    %v312 = vsel %vm94, %v304, 0.0
    %v313 = vsel %vm94, %v305, 0.0
    %v314 = vadd.f32 %v312, %v313
    %v315 = vrot.slane %v314, 4
    %v316 = vadd.f32 %v314, %v315
    %v317 = vrot.slane %v316, 2
    %v318 = vadd.f32 %v316, %v317
    %v319 = vrot.slane %v318, 1
    %v320 = vadd.f32 %v318, %v319
    %v321 = vsel %vm94, %v306, 0.0
    %v322 = vsel %vm94, %v307, 0.0
    %v323 = vadd.f32 %v321, %v322
    %v324 = vrot.slane %v323, 4
    %v325 = vadd.f32 %v323, %v324
    %v326 = vrot.slane %v325, 2
    %v327 = vadd.f32 %v325, %v326
    %v328 = vrot.slane %v327, 1
    %v329 = vadd.f32 %v327, %v328
    %v330 = vsel %vm94, %v308, 0.0
    %v331 = vsel %vm94, %v309, 0.0
    %v332 = vadd.f32 %v330, %v331
    %v333 = vrot.slane %v332, 4
    %v334 = vadd.f32 %v332, %v333
    %v335 = vrot.slane %v334, 2
    %v336 = vadd.f32 %v334, %v335
    %v337 = vrot.slane %v336, 1
    %v338 = vadd.f32 %v336, %v337
    %v339 = vsel %vm94, %v310, 0.0
    %v340 = vsel %vm94, %v311, 0.0
    %v341 = vadd.f32 %v339, %v340
    %v342 = vrot.slane %v341, 4
    %v343 = vadd.f32 %v341, %v342
    %v344 = vrot.slane %v343, 2
    %v345 = vadd.f32 %v343, %v344
    %v346 = vrot.slane %v345, 1
    %v347 = vadd.f32 %v345, %v346
    %v348 = vmul.f32 %v320, 2.0
    %v349 = vmul.f32 %v329, 2.0
    %v350 = vmul.f32 %v338, 2.0
    %v351 = vmul.f32 %v347, 2.0
    %vm356 = vcmask 1041409
    %v357 = vsel %vm356, %v349, %v348
    %vm358 = vcmask 1042434
    %v359 = vsel %vm358, %v350, %v357
    %vm360 = vcmask 1043459
    %v361 = vsel %vm360, %v351, %v359
    %v363 = vadd.f32 %v303, %v361
    %vm364 = vcmask 125952
    %365 = vst.msk [vmem:[#allocation7] sm:$0xf] %vm364, %v363
    %v366 = vld [vmem:[#allocation8] sm:$0xf]
    %v367 = vsel %vm94, %v101, 0.0
    %v368 = vsel %vm94, %v108, 0.0
    %v369 = vadd.f32 %v367, %v368
    %v370 = vrot.slane %v369, 4
    %v371 = vadd.f32 %v369, %v370
    %v372 = vrot.slane %v371, 2
    %v373 = vadd.f32 %v371, %v372
    %v374 = vrot.slane %v373, 1
    %v375 = vadd.f32 %v373, %v374
    %v376 = vsel %vm94, %v115, 0.0
    %v377 = vsel %vm94, %v122, 0.0
    %v378 = vadd.f32 %v376, %v377
    %v379 = vrot.slane %v378, 4
    %v380 = vadd.f32 %v378, %v379
    %v381 = vrot.slane %v380, 2
    %v382 = vadd.f32 %v380, %v381
    %v383 = vrot.slane %v382, 1
    %v384 = vadd.f32 %v382, %v383
    %v385 = vsel %vm94, %v129, 0.0
    %v386 = vsel %vm94, %v136, 0.0
    %v387 = vadd.f32 %v385, %v386
    %v388 = vrot.slane %v387, 4
    %v389 = vadd.f32 %v387, %v388
    %v390 = vrot.slane %v389, 2
    %v391 = vadd.f32 %v389, %v390
    %v392 = vrot.slane %v391, 1
    %v393 = vadd.f32 %v391, %v392
    %v394 = vsel %vm94, %v143, 0.0
    %v395 = vsel %vm94, %v150, 0.0
    %v396 = vadd.f32 %v394, %v395
    %v397 = vrot.slane %v396, 4
    %v398 = vadd.f32 %v396, %v397
    %v399 = vrot.slane %v398, 2
    %v400 = vadd.f32 %v398, %v399
    %v401 = vrot.slane %v400, 1
    %v402 = vadd.f32 %v400, %v401
    %v403 = vmul.f32 %v375, 4.0
    %v404 = vmul.f32 %v384, 4.0
    %v405 = vmul.f32 %v393, 4.0
    %v406 = vmul.f32 %v402, 4.0
    %v407 = vsel %vm94, %v253, 0.0
    %v408 = vsel %vm94, %v260, 0.0
    %v409 = vadd.f32 %v407, %v408
    %v410 = vrot.slane %v409, 4
    %v411 = vadd.f32 %v409, %v410
    %v412 = vrot.slane %v411, 2
    %v413 = vadd.f32 %v411, %v412
    %v414 = vrot.slane %v413, 1
    %v415 = vadd.f32 %v413, %v414
    %v416 = vsel %vm94, %v267, 0.0
    %v417 = vsel %vm94, %v274, 0.0
    %v418 = vadd.f32 %v416, %v417
    %v419 = vrot.slane %v418, 4
    %v420 = vadd.f32 %v418, %v419
    %v421 = vrot.slane %v420, 2
    %v422 = vadd.f32 %v420, %v421
    %v423 = vrot.slane %v422, 1
    %v424 = vadd.f32 %v422, %v423
    %v425 = vsel %vm94, %v281, 0.0
    %v426 = vsel %vm94, %v288, 0.0
    %v427 = vadd.f32 %v425, %v426
    %v428 = vrot.slane %v427, 4
    %v429 = vadd.f32 %v427, %v428
    %v430 = vrot.slane %v429, 2
    %v431 = vadd.f32 %v429, %v430
    %v432 = vrot.slane %v431, 1
    %v433 = vadd.f32 %v431, %v432
    %v434 = vsel %vm94, %v295, 0.0
    %v435 = vsel %vm94, %v302, 0.0
    %v436 = vadd.f32 %v434, %v435
    %v437 = vrot.slane %v436, 4
    %v438 = vadd.f32 %v436, %v437
    %v439 = vrot.slane %v438, 2
    %v440 = vadd.f32 %v438, %v439
    %v441 = vrot.slane %v440, 1
    %v442 = vadd.f32 %v440, %v441
    %v443 = vmul.f32 %v415, 4.0
    %v444 = vmul.f32 %v424, 4.0
    %v445 = vmul.f32 %v433, 4.0
    %v446 = vmul.f32 %v442, 4.0
    %v447 = vadd.f32 %v403, %v443
    %v448 = vadd.f32 %v404, %v444
    %v449 = vadd.f32 %v405, %v445
    %v450 = vadd.f32 %v406, %v446
    %v455 = vsel %vm356, %v448, %v447
    %v456 = vsel %vm358, %v449, %v455
    %v457 = vsel %vm360, %v450, %v456
    %v459 = vadd.f32 %v366, %v457
    %460 = vst.msk [vmem:[#allocation8] sm:$0xf] %vm364, %v459
    // Predicated region
    $region22: #{tpu_custom_call.1} parent=1 // pred_check
      _
    $region23: #{tpu_custom_call.1} parent=1 // pred_check_branch
      %462 = sbr.rel (0) target = $region25
    $region24: #{tpu_custom_call.1} parent=1 // pred_region
      %464 = vsyncadd [#allocation4], 0
      %s466 = sshll.u32 [#allocation7], 4
      %s467 = int_to_ptr.vmem [resolvable:$true] %s466
      %s468 = sshll.u32 %s2, 4
      %s469 = int_to_ptr.hbm [resolvable:$true] %s468
      %471 = dma.vmem_to_hbm [thread:$0]  %s467, 64, %s469, [#allocation4]
    $region25: #{tpu_custom_call.1} parent=1 // pred_fallthru
      _
    // Predicated region
    $region26: #{tpu_custom_call.1} parent=1 // pred_check
      _
    $region27: #{tpu_custom_call.1} parent=1 // pred_check_branch
      %473 = sbr.rel (0) target = $region29
    $region28: #{tpu_custom_call.1} parent=1 // pred_region
      %475 = vsyncadd [#allocation9], 0
      %s477 = sshll.u32 [#allocation8], 4
      %s478 = int_to_ptr.vmem [resolvable:$true] %s477
      %s479 = sshll.u32 %s3, 4
      %s480 = int_to_ptr.hbm [resolvable:$true] %s479
      %482 = dma.vmem_to_hbm [thread:$0]  %s478, 64, %s480, [#allocation9]
    $region29: #{tpu_custom_call.1} parent=1 // pred_fallthru
      _
    // Predicated region
    $region30: #{tpu_custom_call.1} parent=1 // pred_check
      _
    $region31: #{tpu_custom_call.1} parent=1 // pred_check_branch
      %484 = sbr.rel (0) target = $region33
    $region32: #{tpu_custom_call.1} parent=1 // pred_region
      %486 = dma.done [#allocation4], 64
    $region33: #{tpu_custom_call.1} parent=1 // pred_fallthru
      _
    // Predicated region
    $region34: #{tpu_custom_call.1} parent=1 // pred_check
      _
    $region35: #{tpu_custom_call.1} parent=1 // pred_check_branch
      %488 = sbr.rel (0) target = $region37
    $region36: #{tpu_custom_call.1} parent=1 // pred_region
      %490 = dma.done [#allocation9], 64
    $region37: #{tpu_custom_call.1} parent=1 // pred_fallthru
      _
    %491 = vsyncpa [#allocation3], 1
    %492 = vsyncpa [#allocation6], 1
    %493 = vsyncpa [#allocation4], 1
    %494 = vsyncpa [#allocation9], 1

</llo_original>
